<compile_context>
chip_gen: v7x
topology: tpu7x:2x2x1
jax: 0.10.0
libtpu: 0.0.40
codegen_flags: <defaults>
</compile_context>

<pallas_src>
import functools

import jax
import jax.numpy as jnp
from jax.experimental import pallas as pl
from jax.experimental.pallas import tpu as pltpu


def decoder1_kernel(num_layers, hidden_size,
                    x_ref, eo_ref, h_ref, c_ref,
                    wc_ref, bc_ref, wl_ref, bl_ref,
                    hout_ref, cout_ref):
    H = hidden_size
    x = x_ref[...]                                          # (B, H); dropout = identity (eval)

    # attn_weights = softmax over a size-1 axis == 1.0 exactly, so
    # attn_applied == encoder_outputs.sum(0).  (Major-axis VPU reduction.)
    attn_applied = jnp.sum(eo_ref[...], axis=0)             # (B, H)

    # attn_combine(cat(x, attn_applied)) + ReLU.  Packed (2H, H) weight, split into
    # its two H-row halves: cat(a, b) @ W == a @ W[:H] + b @ W[H:].
    wc = wc_ref[...]                                        # (2H, H)
    lstm_in = (jnp.dot(x, wc[:H], preferred_element_type=jnp.float32)
               + jnp.dot(attn_applied, wc[H:], preferred_element_type=jnp.float32)
               + bc_ref[...])
    lstm_in = jnp.maximum(lstm_in, 0.0)                     # (B, H)

    # num_layers-deep LSTM, single timestep.  All four gates per layer come out of a
    # single fused (B, 4H) result per operand; gate order (i, f, g, o) on the lane
    # axis; 4H == 128 lanes for H == 32 (a full vreg).  Bias is b_ih + b_hh pre-summed.
    layer_in = lstm_in
    for l in range(num_layers):                             # static unroll (L is small)
        h_prev = h_ref[l]                                   # (B, H)
        c_prev = c_ref[l]
        w = wl_ref[l]                                       # (2H, 4H) = [W_ih.T ; W_hh.T]
        gates = (jnp.dot(layer_in, w[:H], preferred_element_type=jnp.float32)
                 + jnp.dot(h_prev, w[H:], preferred_element_type=jnp.float32)
                 + bl_ref[l])                               # (B, 4H)
        i_g = jax.nn.sigmoid(gates[:, 0 * H:1 * H])
        f_g = jax.nn.sigmoid(gates[:, 1 * H:2 * H])
        g_g = jnp.tanh(gates[:, 2 * H:3 * H])
        o_g = jax.nn.sigmoid(gates[:, 3 * H:4 * H])
        c_new = f_g * c_prev + i_g * g_g
        h_new = o_g * jnp.tanh(c_new)
        hout_ref[l] = h_new
        cout_ref[l] = c_new
        layer_in = h_new                                    # feeds next layer (eval: no dropout)


def decoder1_forward(params, x, hidden, cell,
                     encoder_outputs, encoder_hidden, encoder_cell):
    # encoder_hidden only feeds the attn Linear whose output passes through a softmax
    # over a size-1 axis (== 1.0), so it cannot affect the result; encoder_cell is
    # unused by the original forward.  Kept for signature parity.
    del encoder_hidden, encoder_cell

    L, B, H = hidden.shape
    x2d = x[0]                                              # (1, B, E) -> (B, E); E == H

    # Pack parameters into the kernel's fused layout (wrapper glue; pack once and
    # reuse across steps in a real decode loop).
    wc = params['w_combine'].T                              # (2H, H)
    bc = params['b_combine'][None, :]                       # (1, H)
    wl = jnp.concatenate([jnp.swapaxes(params['w_ih'], 1, 2),
                          jnp.swapaxes(params['w_hh'], 1, 2)], axis=1)   # (L, 2H, 4H)
    bl = (params['b_ih'] + params['b_hh'])[:, None, :]      # (L, 1, 4H)

    vmem = functools.partial(pl.BlockSpec, memory_space=pltpu.MemorySpace.VMEM)
    kernel = functools.partial(decoder1_kernel, L, H)

    hout, cout = pl.pallas_call(
        kernel,
        out_shape=(jax.ShapeDtypeStruct((L, B, H), jnp.float32),
                   jax.ShapeDtypeStruct((L, B, H), jnp.float32)),
        in_specs=[vmem()] * 8,
        out_specs=(vmem(), vmem()),
    )(x2d, encoder_outputs, hidden, cell, wc, bc, wl, bl)

    outputs = hout[L - 1:L]                                 # (1, B, H): seq-len-1 LSTM output
    return outputs, hout, cout


def init_params(key, embed_size, hidden_size, num_layers):
    # PyTorch-layout parameters for decoder1 (Linear weights are (out, in); LSTM
    # weight_ih/_hh are (4H, H) with gate chunks in order i, f, g, o).
    assert embed_size == hidden_size, "module requires embed_size == hidden_size"
    H, L = hidden_size, num_layers
    ks = jax.random.split(key, 8)

    def rnd(k, shape, scale=0.1):
        return jax.random.normal(k, shape, dtype=jnp.float32) * scale

    return dict(
        w_attn=rnd(ks[0], (1, 2 * H)),        # nn.Linear(2H, 1) — never affects the output
        b_attn=rnd(ks[1], (1,)),
        w_combine=rnd(ks[2], (H, 2 * H)),     # nn.Linear(2H, H)
        b_combine=rnd(ks[3], (H,)),
        w_ih=rnd(ks[4], (L, 4 * H, H)),       # LSTM weight_ih_l{k}
        w_hh=rnd(ks[5], (L, 4 * H, H)),       # LSTM weight_hh_l{k}
        b_ih=rnd(ks[6], (L, 4 * H)),
        b_hh=rnd(ks[7], (L, 4 * H)),
    )


def decoder1_reference(params, x, hidden, cell,
                       encoder_outputs, encoder_hidden, encoder_cell):
    """Pure-JAX mirror of decoder1.forward (eval mode; B > 1 so squeeze(1) is a no-op).
    Computes the full attn path (including the size-1 softmax) to verify the kernel's
    simplification is exact."""
    del encoder_cell
    H = hidden.shape[-1]
    emb = x                                                              # dropout identity
    attn_in = jnp.concatenate([emb, encoder_hidden[None]], axis=-1)      # (1, B, 2H)
    attn_w = jax.nn.softmax(attn_in @ params['w_attn'].T + params['b_attn'], axis=-1)  # (1,B,1)
    attn_applied = jnp.sum(attn_w * encoder_outputs, axis=0, keepdims=True)            # (1,B,H)
    out = (jnp.concatenate([emb, attn_applied], axis=-1) @ params['w_combine'].T
           + params['b_combine'])
    out = jnp.maximum(out, 0.0)                                          # (1, B, H)
    layer_in = out[0]
    hs, cs = [], []
    for l in range(hidden.shape[0]):
        gates = (layer_in @ params['w_ih'][l].T + hidden[l] @ params['w_hh'][l].T
                 + params['b_ih'][l] + params['b_hh'][l])
        i = jax.nn.sigmoid(gates[:, 0 * H:1 * H])
        f = jax.nn.sigmoid(gates[:, 1 * H:2 * H])
        g = jnp.tanh(gates[:, 2 * H:3 * H])
        o = jax.nn.sigmoid(gates[:, 3 * H:4 * H])
        c_new = f * cell[l] + i * g
        h_new = o * jnp.tanh(c_new)
        hs.append(h_new)
        cs.append(c_new)
        layer_in = h_new
    hout = jnp.stack(hs)
    cout = jnp.stack(cs)
    return hout[-1:], hout, cout


if __name__ == "__main__":
    B, H, S, L = 4, 32, 8, 2          # batch, hidden/embed size, encoder seq len, num_layers
    E = H                             # module requires embed_size == hidden_size

    key = jax.random.PRNGKey(0)
    kp, kx, kh, kc, keo, keh, kec = jax.random.split(key, 7)
    params = init_params(kp, E, H, L)

    x = jax.random.normal(kx, (1, B, E), jnp.float32) * 0.1          # one decoder timestep
    hidden = jax.random.normal(kh, (L, B, H), jnp.float32) * 0.1
    cell = jax.random.normal(kc, (L, B, H), jnp.float32) * 0.1
    enc_out = jax.random.normal(keo, (S, B, H), jnp.float32) * 0.1   # seq-major encoder outputs
    enc_hid = jax.random.normal(keh, (B, H), jnp.float32) * 0.1
    enc_cell = jax.random.normal(kec, (B, H), jnp.float32) * 0.1     # unused by forward

    out, hout, cout = decoder1_forward(params, x, hidden, cell, enc_out, enc_hid, enc_cell)
    jax.block_until_ready((out, hout, cout))

    r_out, r_h, r_c = decoder1_reference(params, x, hidden, cell, enc_out, enc_hid, enc_cell)
    assert out.shape == (1, B, H) and hout.shape == (L, B, H) and cout.shape == (L, B, H)
    assert jnp.allclose(out, r_out, atol=1e-5), "outputs mismatch"
    assert jnp.allclose(hout, r_h, atol=1e-5), "hidden mismatch"
    assert jnp.allclose(cout, r_c, atol=1e-5), "cell mismatch"

    # TODO(synk): training-mode dropout (self.drop and the LSTM inter-layer dropout) is
    # not implemented; the kernel implements eval-mode (identity) semantics.
    print("KERNEL_OK")
</pallas_src>

<mosaic_0001>
module attributes {stable_mosaic.version = 11 : i64} {
  func.func @decoder1_kernel(%arg0: memref<4x32xf32, #tpu.memory_space<vmem>>, %arg1: memref<8x4x32xf32, #tpu.memory_space<vmem>>, %arg2: memref<2x4x32xf32, #tpu.memory_space<vmem>>, %arg3: memref<2x4x32xf32, #tpu.memory_space<vmem>>, %arg4: memref<64x32xf32, #tpu.memory_space<vmem>>, %arg5: memref<1x32xf32, #tpu.memory_space<vmem>>, %arg6: memref<2x64x128xf32, #tpu.memory_space<vmem>>, %arg7: memref<2x1x128xf32, #tpu.memory_space<vmem>>, %arg8: memref<2x4x32xf32, #tpu.memory_space<vmem>>, %arg9: memref<2x4x32xf32, #tpu.memory_space<vmem>>) attributes {dimension_semantics = [], scalar_prefetch = 0 : i64, scratch_operands = 0 : i64, tpu.core_type = #tpu.core_type<tc>} {
    %c0 = arith.constant 0 : index
    %c0_0 = arith.constant 0 : index
    %0 = vector.load %arg0[%c0, %c0_0] : memref<4x32xf32, #tpu.memory_space<vmem>>, vector<4x32xf32>
    %c0_1 = arith.constant 0 : index
    %c0_2 = arith.constant 0 : index
    %c0_3 = arith.constant 0 : index
    %1 = vector.load %arg1[%c0_1, %c0_2, %c0_3] : memref<8x4x32xf32, #tpu.memory_space<vmem>>, vector<8x4x32xf32>
    %cst = arith.constant dense<0.000000e+00> : vector<4x32xf32>
    %2 = vector.multi_reduction <add>, %1, %cst [0] : vector<8x4x32xf32> to vector<4x32xf32>
    %c0_4 = arith.constant 0 : index
    %c0_5 = arith.constant 0 : index
    %3 = vector.load %arg4[%c0_4, %c0_5] : memref<64x32xf32, #tpu.memory_space<vmem>>, vector<64x32xf32>
    %4 = vector.extract_strided_slice %3 {offsets = [0, 0], sizes = [32, 32], strides = [1, 1]} : vector<64x32xf32> to vector<32x32xf32>
    %cst_6 = arith.constant dense<0.000000e+00> : vector<4x32xf32>
    %5 = tpu.matmul %0, %4, %cst_6 {dimension_numbers = #tpu.dot_dimension_numbers<[1], [0], [0], [1], [0, 0, 1, 1], [], []>} : vector<4x32xf32>, vector<32x32xf32>, vector<4x32xf32> -> vector<4x32xf32>
    %6 = vector.extract_strided_slice %3 {offsets = [32, 0], sizes = [32, 32], strides = [1, 1]} : vector<64x32xf32> to vector<32x32xf32>
    %cst_7 = arith.constant dense<0.000000e+00> : vector<4x32xf32>
    %7 = tpu.matmul %2, %6, %cst_7 {dimension_numbers = #tpu.dot_dimension_numbers<[1], [0], [0], [1], [0, 0, 1, 1], [], []>} : vector<4x32xf32>, vector<32x32xf32>, vector<4x32xf32> -> vector<4x32xf32>
    %8 = arith.addf %5, %7 : vector<4x32xf32>
    %c0_8 = arith.constant 0 : index
    %c0_9 = arith.constant 0 : index
    %9 = vector.load %arg5[%c0_8, %c0_9] : memref<1x32xf32, #tpu.memory_space<vmem>>, vector<1x32xf32>
    %10 = vector.broadcast %9 : vector<1x32xf32> to vector<4x32xf32>
    %11 = arith.addf %8, %10 : vector<4x32xf32>
    %cst_10 = arith.constant 0.000000e+00 : f32
    %12 = vector.broadcast %cst_10 : f32 to vector<4x32xf32>
    %13 = arith.maximumf %11, %12 : vector<4x32xf32>
    %c0_11 = arith.constant 0 : index
    %c0_12 = arith.constant 0 : index
    %c0_13 = arith.constant 0 : index
    %14 = vector.load %arg2[%c0_11, %c0_12, %c0_13] : memref<2x4x32xf32, #tpu.memory_space<vmem>>, vector<1x4x32xf32>
    %15 = vector.shape_cast %14 : vector<1x4x32xf32> to vector<4x32xf32>
    %c0_14 = arith.constant 0 : index
    %c0_15 = arith.constant 0 : index
    %c0_16 = arith.constant 0 : index
    %16 = vector.load %arg3[%c0_14, %c0_15, %c0_16] : memref<2x4x32xf32, #tpu.memory_space<vmem>>, vector<1x4x32xf32>
    %17 = vector.shape_cast %16 : vector<1x4x32xf32> to vector<4x32xf32>
    %c0_17 = arith.constant 0 : index
    %c0_18 = arith.constant 0 : index
    %c0_19 = arith.constant 0 : index
    %18 = vector.load %arg6[%c0_17, %c0_18, %c0_19] : memref<2x64x128xf32, #tpu.memory_space<vmem>>, vector<1x64x128xf32>
    %19 = vector.shape_cast %18 : vector<1x64x128xf32> to vector<64x128xf32>
    %20 = vector.extract_strided_slice %19 {offsets = [0, 0], sizes = [32, 128], strides = [1, 1]} : vector<64x128xf32> to vector<32x128xf32>
    %cst_20 = arith.constant dense<0.000000e+00> : vector<4x128xf32>
    %21 = tpu.matmul %13, %20, %cst_20 {dimension_numbers = #tpu.dot_dimension_numbers<[1], [0], [0], [1], [0, 0, 1, 1], [], []>} : vector<4x32xf32>, vector<32x128xf32>, vector<4x128xf32> -> vector<4x128xf32>
    %22 = vector.extract_strided_slice %19 {offsets = [32, 0], sizes = [32, 128], strides = [1, 1]} : vector<64x128xf32> to vector<32x128xf32>
    %cst_21 = arith.constant dense<0.000000e+00> : vector<4x128xf32>
    %23 = tpu.matmul %15, %22, %cst_21 {dimension_numbers = #tpu.dot_dimension_numbers<[1], [0], [0], [1], [0, 0, 1, 1], [], []>} : vector<4x32xf32>, vector<32x128xf32>, vector<4x128xf32> -> vector<4x128xf32>
    %24 = arith.addf %21, %23 : vector<4x128xf32>
    %c0_22 = arith.constant 0 : index
    %c0_23 = arith.constant 0 : index
    %c0_24 = arith.constant 0 : index
    %25 = vector.load %arg7[%c0_22, %c0_23, %c0_24] : memref<2x1x128xf32, #tpu.memory_space<vmem>>, vector<1x1x128xf32>
    %26 = vector.shape_cast %25 : vector<1x1x128xf32> to vector<1x128xf32>
    %27 = vector.broadcast %26 : vector<1x128xf32> to vector<4x128xf32>
    %28 = arith.addf %24, %27 : vector<4x128xf32>
    %29 = vector.extract_strided_slice %28 {offsets = [0, 0], sizes = [4, 32], strides = [1, 1]} : vector<4x128xf32> to vector<4x32xf32>
    %30 = arith.negf %29 : vector<4x32xf32>
    %31 = math.exp %30 : vector<4x32xf32>
    %cst_25 = arith.constant 1.000000e+00 : f32
    %32 = vector.broadcast %cst_25 : f32 to vector<4x32xf32>
    %33 = arith.addf %32, %31 : vector<4x32xf32>
    %34 = arith.divf %32, %33 : vector<4x32xf32>
    %35 = vector.extract_strided_slice %28 {offsets = [0, 32], sizes = [4, 32], strides = [1, 1]} : vector<4x128xf32> to vector<4x32xf32>
    %36 = arith.negf %35 : vector<4x32xf32>
    %37 = math.exp %36 : vector<4x32xf32>
    %cst_26 = arith.constant 1.000000e+00 : f32
    %38 = vector.broadcast %cst_26 : f32 to vector<4x32xf32>
    %39 = arith.addf %38, %37 : vector<4x32xf32>
    %40 = arith.divf %38, %39 : vector<4x32xf32>
    %41 = vector.extract_strided_slice %28 {offsets = [0, 64], sizes = [4, 32], strides = [1, 1]} : vector<4x128xf32> to vector<4x32xf32>
    %42 = math.tanh %41 : vector<4x32xf32>
    %43 = vector.extract_strided_slice %28 {offsets = [0, 96], sizes = [4, 32], strides = [1, 1]} : vector<4x128xf32> to vector<4x32xf32>
    %44 = arith.negf %43 : vector<4x32xf32>
    %45 = math.exp %44 : vector<4x32xf32>
    %cst_27 = arith.constant 1.000000e+00 : f32
    %46 = vector.broadcast %cst_27 : f32 to vector<4x32xf32>
    %47 = arith.addf %46, %45 : vector<4x32xf32>
    %48 = arith.divf %46, %47 : vector<4x32xf32>
    %49 = arith.mulf %40, %17 : vector<4x32xf32>
    %50 = arith.mulf %34, %42 : vector<4x32xf32>
    %51 = arith.addf %49, %50 : vector<4x32xf32>
    %52 = math.tanh %51 : vector<4x32xf32>
    %53 = arith.mulf %48, %52 : vector<4x32xf32>
    %c0_28 = arith.constant 0 : index
    %c0_29 = arith.constant 0 : index
    %c0_30 = arith.constant 0 : index
    %54 = vector.load %arg8[%c0_28, %c0_29, %c0_30] : memref<2x4x32xf32, #tpu.memory_space<vmem>>, vector<1x4x32xf32>
    %55 = vector.shape_cast %54 : vector<1x4x32xf32> to vector<4x32xf32>
    %56 = vector.shape_cast %53 : vector<4x32xf32> to vector<1x4x32xf32>
    tpu.vector_store %arg8[%c0_28, %c0_29, %c0_30], %56 {strides = array<i32>} : memref<2x4x32xf32, #tpu.memory_space<vmem>>, vector<1x4x32xf32>,
    %c0_31 = arith.constant 0 : index
    %c0_32 = arith.constant 0 : index
    %c0_33 = arith.constant 0 : index
    %57 = vector.load %arg9[%c0_31, %c0_32, %c0_33] : memref<2x4x32xf32, #tpu.memory_space<vmem>>, vector<1x4x32xf32>
    %58 = vector.shape_cast %57 : vector<1x4x32xf32> to vector<4x32xf32>
    %59 = vector.shape_cast %51 : vector<4x32xf32> to vector<1x4x32xf32>
    tpu.vector_store %arg9[%c0_31, %c0_32, %c0_33], %59 {strides = array<i32>} : memref<2x4x32xf32, #tpu.memory_space<vmem>>, vector<1x4x32xf32>,
    %c1 = arith.constant 1 : index
    %c0_34 = arith.constant 0 : index
    %c0_35 = arith.constant 0 : index
    %60 = vector.load %arg2[%c1, %c0_34, %c0_35] : memref<2x4x32xf32, #tpu.memory_space<vmem>>, vector<1x4x32xf32>
    %61 = vector.shape_cast %60 : vector<1x4x32xf32> to vector<4x32xf32>
    %c1_36 = arith.constant 1 : index
    %c0_37 = arith.constant 0 : index
    %c0_38 = arith.constant 0 : index
    %62 = vector.load %arg3[%c1_36, %c0_37, %c0_38] : memref<2x4x32xf32, #tpu.memory_space<vmem>>, vector<1x4x32xf32>
    %63 = vector.shape_cast %62 : vector<1x4x32xf32> to vector<4x32xf32>
    %c1_39 = arith.constant 1 : index
    %c0_40 = arith.constant 0 : index
    %c0_41 = arith.constant 0 : index
    %64 = vector.load %arg6[%c1_39, %c0_40, %c0_41] : memref<2x64x128xf32, #tpu.memory_space<vmem>>, vector<1x64x128xf32>
    %65 = vector.shape_cast %64 : vector<1x64x128xf32> to vector<64x128xf32>
    %66 = vector.extract_strided_slice %65 {offsets = [0, 0], sizes = [32, 128], strides = [1, 1]} : vector<64x128xf32> to vector<32x128xf32>
    %cst_42 = arith.constant dense<0.000000e+00> : vector<4x128xf32>
    %67 = tpu.matmul %53, %66, %cst_42 {dimension_numbers = #tpu.dot_dimension_numbers<[1], [0], [0], [1], [0, 0, 1, 1], [], []>} : vector<4x32xf32>, vector<32x128xf32>, vector<4x128xf32> -> vector<4x128xf32>
    %68 = vector.extract_strided_slice %65 {offsets = [32, 0], sizes = [32, 128], strides = [1, 1]} : vector<64x128xf32> to vector<32x128xf32>
    %cst_43 = arith.constant dense<0.000000e+00> : vector<4x128xf32>
    %69 = tpu.matmul %61, %68, %cst_43 {dimension_numbers = #tpu.dot_dimension_numbers<[1], [0], [0], [1], [0, 0, 1, 1], [], []>} : vector<4x32xf32>, vector<32x128xf32>, vector<4x128xf32> -> vector<4x128xf32>
    %70 = arith.addf %67, %69 : vector<4x128xf32>
    %c1_44 = arith.constant 1 : index
    %c0_45 = arith.constant 0 : index
    %c0_46 = arith.constant 0 : index
    %71 = vector.load %arg7[%c1_44, %c0_45, %c0_46] : memref<2x1x128xf32, #tpu.memory_space<vmem>>, vector<1x1x128xf32>
    %72 = vector.shape_cast %71 : vector<1x1x128xf32> to vector<1x128xf32>
    %73 = vector.broadcast %72 : vector<1x128xf32> to vector<4x128xf32>
    %74 = arith.addf %70, %73 : vector<4x128xf32>
    %75 = vector.extract_strided_slice %74 {offsets = [0, 0], sizes = [4, 32], strides = [1, 1]} : vector<4x128xf32> to vector<4x32xf32>
    %76 = arith.negf %75 : vector<4x32xf32>
    %77 = math.exp %76 : vector<4x32xf32>
    %cst_47 = arith.constant 1.000000e+00 : f32
    %78 = vector.broadcast %cst_47 : f32 to vector<4x32xf32>
    %79 = arith.addf %78, %77 : vector<4x32xf32>
    %80 = arith.divf %78, %79 : vector<4x32xf32>
    %81 = vector.extract_strided_slice %74 {offsets = [0, 32], sizes = [4, 32], strides = [1, 1]} : vector<4x128xf32> to vector<4x32xf32>
    %82 = arith.negf %81 : vector<4x32xf32>
    %83 = math.exp %82 : vector<4x32xf32>
    %cst_48 = arith.constant 1.000000e+00 : f32
    %84 = vector.broadcast %cst_48 : f32 to vector<4x32xf32>
    %85 = arith.addf %84, %83 : vector<4x32xf32>
    %86 = arith.divf %84, %85 : vector<4x32xf32>
    %87 = vector.extract_strided_slice %74 {offsets = [0, 64], sizes = [4, 32], strides = [1, 1]} : vector<4x128xf32> to vector<4x32xf32>
    %88 = math.tanh %87 : vector<4x32xf32>
    %89 = vector.extract_strided_slice %74 {offsets = [0, 96], sizes = [4, 32], strides = [1, 1]} : vector<4x128xf32> to vector<4x32xf32>
    %90 = arith.negf %89 : vector<4x32xf32>
    %91 = math.exp %90 : vector<4x32xf32>
    %cst_49 = arith.constant 1.000000e+00 : f32
    %92 = vector.broadcast %cst_49 : f32 to vector<4x32xf32>
    %93 = arith.addf %92, %91 : vector<4x32xf32>
    %94 = arith.divf %92, %93 : vector<4x32xf32>
    %95 = arith.mulf %86, %63 : vector<4x32xf32>
    %96 = arith.mulf %80, %88 : vector<4x32xf32>
    %97 = arith.addf %95, %96 : vector<4x32xf32>
    %98 = math.tanh %97 : vector<4x32xf32>
    %99 = arith.mulf %94, %98 : vector<4x32xf32>
    %c1_50 = arith.constant 1 : index
    %c0_51 = arith.constant 0 : index
    %c0_52 = arith.constant 0 : index
    %100 = vector.load %arg8[%c1_50, %c0_51, %c0_52] : memref<2x4x32xf32, #tpu.memory_space<vmem>>, vector<1x4x32xf32>
    %101 = vector.shape_cast %100 : vector<1x4x32xf32> to vector<4x32xf32>
    %102 = vector.shape_cast %99 : vector<4x32xf32> to vector<1x4x32xf32>
    tpu.vector_store %arg8[%c1_50, %c0_51, %c0_52], %102 {strides = array<i32>} : memref<2x4x32xf32, #tpu.memory_space<vmem>>, vector<1x4x32xf32>,
    %c1_53 = arith.constant 1 : index
    %c0_54 = arith.constant 0 : index
    %c0_55 = arith.constant 0 : index
    %103 = vector.load %arg9[%c1_53, %c0_54, %c0_55] : memref<2x4x32xf32, #tpu.memory_space<vmem>>, vector<1x4x32xf32>
    %104 = vector.shape_cast %103 : vector<1x4x32xf32> to vector<4x32xf32>
    %105 = vector.shape_cast %97 : vector<4x32xf32> to vector<1x4x32xf32>
    tpu.vector_store %arg9[%c1_53, %c0_54, %c0_55], %105 {strides = array<i32>} : memref<2x4x32xf32, #tpu.memory_space<vmem>>, vector<1x4x32xf32>,
    return
  }
}

</mosaic_0001>

<llo_original>
// kernel: tpu_custom_call.1
$region0: #{tpu_custom_call.1}
  #allocation0 [shape = 'u32[]', space=smem, size = 0x4, offset = 0x4, fixed_abs, tag = 'smem constant byte address 0x4 - core index']
  #allocation1 [shape = 'u32[144,128]{1,0:T(1,128)}', space=vmem, size = 0x12000, scoped, tag = 'internal scratch']
  %s0 = inlined_call_operand.vmem [shape: f32[4,32], index: 0, kind: input, shape index: {}]
  %s1 = inlined_call_operand.vmem [shape: f32[8,4,32], index: 1, kind: input, shape index: {}]
  %s2 = inlined_call_operand.vmem [shape: f32[2,4,32], index: 2, kind: input, shape index: {}]
  %s3 = inlined_call_operand.vmem [shape: f32[2,4,32], index: 3, kind: input, shape index: {}]
  %s4 = inlined_call_operand.vmem [shape: f32[64,32], index: 4, kind: input, shape index: {}]
  %s5 = inlined_call_operand.vmem [shape: f32[1,32], index: 5, kind: input, shape index: {}]
  %s6 = inlined_call_operand.hbm [shape: f32[2,64,128], index: 6, kind: input, shape index: {}]
  %s7 = inlined_call_operand.vmem [shape: f32[2,1,128], index: 7, kind: input, shape index: {}]
  %s8 = inlined_call_operand.hbm [shape: f32[2,4,32], index: 8, kind: output, shape index: {0}]
  %s9 = inlined_call_operand.hbm [shape: f32[2,4,32], index: 9, kind: output, shape index: {1}]
  %10 = xla_tuple %s8, %s9
  %s11 = sld [smem:[#allocation0]]
  $region54: #{tpu_custom_call.1} parent=0
    _
  %s13 = ssub.s32 1, %s11
  %s14 = scalar_select 0, %s13, %s11
  $region1: #{tpu_custom_call.1} parent=0
    #allocation2 [shape = 'u8[65536]{0}', space=vmem, size = 0x10000, scoped, tag = 'input window, operand 6, single buffered']
    #allocation3 [shape = 's32[1]{0}', space=sflag, size = 0x4, scoped, tag = 'scoped memory for tpu_custom_call.1']
    #allocation4 [shape = 's32[1]{0}', space=sflag, size = 0x4, scoped, tag = 'scoped memory for tpu_custom_call.1']
    #allocation5 [shape = 'u8[4096]{0}', space=vmem, size = 0x1000, scoped, tag = 'output window, operand 0, single buffered']
    #allocation6 [shape = 'u8[4096]{0}', space=vmem, size = 0x1000, scoped, tag = 'output window, operand 1, single buffered']
    #allocation7 [shape = 's32[1]{0}', space=sflag, size = 0x4, scoped, tag = 'scoped memory for tpu_custom_call.1']
    %15 = vsyncpa [#allocation3], 0
    %16 = vsyncpa [#allocation4], 0
    %17 = vsyncpa [#allocation7], 0
    // Predicated region
    $region2: #{tpu_custom_call.1} parent=1 // pred_check
      _
    $region3: #{tpu_custom_call.1} parent=1 // pred_check_branch
      %19 = sbr.rel (0) target = $region5
    $region4: #{tpu_custom_call.1} parent=1 // pred_region
      _
    $region5: #{tpu_custom_call.1} parent=1 // pred_fallthru
      _
    // Predicated region
    $region6: #{tpu_custom_call.1} parent=1 // pred_check
      _
    $region7: #{tpu_custom_call.1} parent=1 // pred_check_branch
      %21 = sbr.rel (0) target = $region9
    $region8: #{tpu_custom_call.1} parent=1 // pred_region
      _
    $region9: #{tpu_custom_call.1} parent=1 // pred_fallthru
      _
    // Predicated region
    $region10: #{tpu_custom_call.1} parent=1 // pred_check
      _
    $region11: #{tpu_custom_call.1} parent=1 // pred_check_branch
      %23 = sbr.rel (0) target = $region13
    $region12: #{tpu_custom_call.1} parent=1 // pred_region
      _
    $region13: #{tpu_custom_call.1} parent=1 // pred_fallthru
      _
    // Predicated region
    $region14: #{tpu_custom_call.1} parent=1 // pred_check
      _
    $region15: #{tpu_custom_call.1} parent=1 // pred_check_branch
      %25 = sbr.rel (0) target = $region17
    $region16: #{tpu_custom_call.1} parent=1 // pred_region
      _
    $region17: #{tpu_custom_call.1} parent=1 // pred_fallthru
      _
    // Predicated region
    $region18: #{tpu_custom_call.1} parent=1 // pred_check
      _
    $region19: #{tpu_custom_call.1} parent=1 // pred_check_branch
      %27 = sbr.rel (0) target = $region21
    $region20: #{tpu_custom_call.1} parent=1 // pred_region
      _
    $region21: #{tpu_custom_call.1} parent=1 // pred_fallthru
      _
    // Predicated region
    $region22: #{tpu_custom_call.1} parent=1 // pred_check
      _
    $region23: #{tpu_custom_call.1} parent=1 // pred_check_branch
      %29 = sbr.rel (0) target = $region25
    $region24: #{tpu_custom_call.1} parent=1 // pred_region
      _
    $region25: #{tpu_custom_call.1} parent=1 // pred_fallthru
      _
    // Predicated region
    $region26: #{tpu_custom_call.1} parent=1 // pred_check
      _
    $region27: #{tpu_custom_call.1} parent=1 // pred_check_branch
      %31 = sbr.rel (0) target = $region29
    $region28: #{tpu_custom_call.1} parent=1 // pred_region
      %s33 = ssub.s32 2048, 2048
      %34 = vsyncadd [#allocation3], %s33
      %s35 = sshll.u32 [#allocation2], 4
      %s36 = int_to_ptr.vmem [resolvable:$true] %s35
      %41 = dma.hbm_to_vmem [thread:$0]  %s6, 2048, %s36, [#allocation3], 128, 128, 8
    $region29: #{tpu_custom_call.1} parent=1 // pred_fallthru
      _
    // Predicated region
    $region30: #{tpu_custom_call.1} parent=1 // pred_check
      _
    $region31: #{tpu_custom_call.1} parent=1 // pred_check_branch
      %43 = sbr.rel (0) target = $region33
    $region32: #{tpu_custom_call.1} parent=1 // pred_region
      _
    $region33: #{tpu_custom_call.1} parent=1 // pred_fallthru
      _
    // Predicated region
    $region34: #{tpu_custom_call.1} parent=1 // pred_check
      _
    $region35: #{tpu_custom_call.1} parent=1 // pred_check_branch
      %45 = sbr.rel (0) target = $region37
    $region36: #{tpu_custom_call.1} parent=1 // pred_region
      %46 = dma.done [#allocation3], 2048
    $region37: #{tpu_custom_call.1} parent=1 // pred_fallthru
      _
    %v47 = vld [vmem:[%s0] sm:$0xf]
    %v48 = vld [vmem:[%s1] sm:$0xf]
    %v49 = vld [vmem:[%s1 + $0x4] sm:$0xf]
    %v50 = vld [vmem:[%s1 + $0x8] sm:$0xf]
    %v51 = vld [vmem:[%s1 + $0xc] sm:$0xf]
    %v52 = vld [vmem:[%s1 + $0x10] sm:$0xf]
    %v53 = vld [vmem:[%s1 + $0x14] sm:$0xf]
    %v54 = vld [vmem:[%s1 + $0x18] sm:$0xf]
    %v55 = vld [vmem:[%s1 + $0x1c] sm:$0xf]
    %vm56 = vcmask 257024
    %v57 = vsel %vm56, %v48, 0.0
    %v58 = vsel %vm56, %v49, 0.0
    %v59 = vadd.f32 %v57, %v58
    %v60 = vsel %vm56, %v50, 0.0
    %v61 = vadd.f32 %v59, %v60
    %v62 = vsel %vm56, %v51, 0.0
    %v63 = vadd.f32 %v61, %v62
    %v64 = vsel %vm56, %v52, 0.0
    %v65 = vadd.f32 %v63, %v64
    %v66 = vsel %vm56, %v53, 0.0
    %v67 = vadd.f32 %v65, %v66
    %v68 = vsel %vm56, %v54, 0.0
    %v69 = vadd.f32 %v67, %v68
    %v70 = vsel %vm56, %v55, 0.0
    %v71 = vadd.f32 %v69, %v70
    %v72 = vld [vmem:[%s4] sm:$0xff]
    %v73 = vld [vmem:[%s4 + $0x8] sm:$0xff]
    %v74 = vld [vmem:[%s4 + $0x10] sm:$0xff]
    %v75 = vld [vmem:[%s4 + $0x18] sm:$0xff]
    %v76 = vld [vmem:[%s4 + $0x20] sm:$0xff]
    %v77 = vld [vmem:[%s4 + $0x28] sm:$0xff]
    %v78 = vld [vmem:[%s4 + $0x30] sm:$0xff]
    %v79 = vld [vmem:[%s4 + $0x38] sm:$0xff]
    %vm80 = vcmask 261120
    %v82 = vsel %vm80, %v71, 0
    %84 = vmatprep.subr.mxu0 0.0
    %85 = vmatpush1.msra.mxu0 %v76
    %86 = vmatprep.subr.mxu0 0.0
    %87 = vmatpush1.msra.mxu0 %v77
    %88 = vmatprep.subr.mxu0 0.0
    %89 = vmatpush1.msra.mxu0 %v78
    %90 = vmatprep.subr.mxu0 0.0
    %91 = vmatpush1.msra.mxu0 %v79
    %92 = vmatprep.subr.mxu0 0.0
    %93 = vmatpush1.msra.mxu0 0.0
    %94 = vmatprep.subr.mxu0 0.0
    %95 = vmatpush1.msra.mxu0 0.0
    %96 = vmatprep.subr.mxu0 0.0
    %97 = vmatpush1.msra.mxu0 0.0
    %98 = vmatprep.subr.mxu0 0.0
    %99 = vmatpush1.msra.mxu0 0.0
    %100 = vmatprep.subr.mxu0 0.0
    %101 = vmatpush1.msra.mxu0 0.0
    %102 = vmatprep.subr.mxu0 0.0
    %103 = vmatpush1.msra.mxu0 0.0
    %104 = vmatprep.subr.mxu0 0.0
    %105 = vmatpush1.msra.mxu0 0.0
    %106 = vmatprep.subr.mxu0 0.0
    %107 = vmatpush1.msra.mxu0 0.0
    %108 = vmatprep.subr.mxu0 0.0
    %109 = vmatpush1.msra.mxu0 0.0
    %110 = vmatprep.subr.mxu0 0.0
    %111 = vmatpush1.msra.mxu0 0.0
    %112 = vmatprep.subr.mxu0 0.0
    %113 = vmatpush1.msra.mxu0 0.0
    %114 = vmatprep.subr.mxu0 0.0
    %115 = vmatpush1.msra.mxu0 0.0
    %116 = vmatprep.subr.mxu0 0.0
    %117 = vmatpush1.msra.mxu0 0.0
    %118 = vmatprep.subr.mxu0 0.0
    %119 = vmatpush1.msra.mxu0 0.0
    %120 = vmatprep.subr.mxu0 0.0
    %121 = vmatpush1.msra.mxu0 0.0
    %122 = vmatprep.subr.mxu0 0.0
    %123 = vmatpush1.msra.mxu0 0.0
    %124 = vmatprep.subr.mxu0 0.0
    %125 = vmatpush1.msra.mxu0 0.0
    %126 = vmatprep.subr.mxu0 0.0
    %127 = vmatpush1.msra.mxu0 0.0
    %128 = vmatprep.subr.mxu0 0.0
    %129 = vmatpush1.msra.mxu0 0.0
    %130 = vmatprep.subr.mxu0 0.0
    %131 = vmatpush1.msra.mxu0 0.0
    %132 = vmatprep.subr.mxu0 0.0
    %133 = vmatpush1.msra.mxu0 0.0
    %134 = vmatprep.subr.mxu0 0.0
    %135 = vmatpush1.msra.mxu0 0.0
    %136 = vmatprep.subr.mxu0 0.0
    %137 = vmatpush1.msra.mxu0 0.0
    %138 = vmatprep.subr.mxu0 0.0
    %139 = vmatpush1.msra.mxu0 0.0
    %140 = vmatprep.subr.mxu0 0.0
    %141 = vmatpush1.msra.mxu0 0.0
    %142 = vmatprep.subr.mxu0 0.0
    %143 = vmatpush1.msra.mxu0 0.0
    %144 = vmatprep.subr.mxu0 0.0
    %145 = vmatpush1.msra.mxu0 0.0
    %146 = vmatprep.subr.mxu0 0.0
    %147 = vmatpush1.msra.mxu0 0.0
    %148 = vmatprep.mubr.f32.mxu0 0.0
    %149 = vmatmul.mubr.f32.gmra.mrb[0].mxu0 %v82
    %v150 = vpop.f32.mrb[0].mxu0
    %v151 = vadd.f32 0.0, %v150
    %v152 = vpop.f32.mrb[0].mxu0
    %153 = vdwg.mxu0
    %v155 = vsel %vm80, %v47, 0
    %157 = vmatprep.subr.mxu0 0.0
    %158 = vmatpush1.msra.mxu0 %v72
    %159 = vmatprep.subr.mxu0 0.0
    %160 = vmatpush1.msra.mxu0 %v73
    %161 = vmatprep.subr.mxu0 0.0
    %162 = vmatpush1.msra.mxu0 %v74
    %163 = vmatprep.subr.mxu0 0.0
    %164 = vmatpush1.msra.mxu0 %v75
    %165 = vmatprep.subr.mxu0 0.0
    %166 = vmatpush1.msra.mxu0 0.0
    %167 = vmatprep.subr.mxu0 0.0
    %168 = vmatpush1.msra.mxu0 0.0
    %169 = vmatprep.subr.mxu0 0.0
    %170 = vmatpush1.msra.mxu0 0.0
    %171 = vmatprep.subr.mxu0 0.0
    %172 = vmatpush1.msra.mxu0 0.0
    %173 = vmatprep.subr.mxu0 0.0
    %174 = vmatpush1.msra.mxu0 0.0
    %175 = vmatprep.subr.mxu0 0.0
    %176 = vmatpush1.msra.mxu0 0.0
    %177 = vmatprep.subr.mxu0 0.0
    %178 = vmatpush1.msra.mxu0 0.0
    %179 = vmatprep.subr.mxu0 0.0
    %180 = vmatpush1.msra.mxu0 0.0
    %181 = vmatprep.subr.mxu0 0.0
    %182 = vmatpush1.msra.mxu0 0.0
    %183 = vmatprep.subr.mxu0 0.0
    %184 = vmatpush1.msra.mxu0 0.0
    %185 = vmatprep.subr.mxu0 0.0
    %186 = vmatpush1.msra.mxu0 0.0
    %187 = vmatprep.subr.mxu0 0.0
    %188 = vmatpush1.msra.mxu0 0.0
    %189 = vmatprep.subr.mxu0 0.0
    %190 = vmatpush1.msra.mxu0 0.0
    %191 = vmatprep.subr.mxu0 0.0
    %192 = vmatpush1.msra.mxu0 0.0
    %193 = vmatprep.subr.mxu0 0.0
    %194 = vmatpush1.msra.mxu0 0.0
    %195 = vmatprep.subr.mxu0 0.0
    %196 = vmatpush1.msra.mxu0 0.0
    %197 = vmatprep.subr.mxu0 0.0
    %198 = vmatpush1.msra.mxu0 0.0
    %199 = vmatprep.subr.mxu0 0.0
    %200 = vmatpush1.msra.mxu0 0.0
    %201 = vmatprep.subr.mxu0 0.0
    %202 = vmatpush1.msra.mxu0 0.0
    %203 = vmatprep.subr.mxu0 0.0
    %204 = vmatpush1.msra.mxu0 0.0
    %205 = vmatprep.subr.mxu0 0.0
    %206 = vmatpush1.msra.mxu0 0.0
    %207 = vmatprep.subr.mxu0 0.0
    %208 = vmatpush1.msra.mxu0 0.0
    %209 = vmatprep.subr.mxu0 0.0
    %210 = vmatpush1.msra.mxu0 0.0
    %211 = vmatprep.subr.mxu0 0.0
    %212 = vmatpush1.msra.mxu0 0.0
    %213 = vmatprep.subr.mxu0 0.0
    %214 = vmatpush1.msra.mxu0 0.0
    %215 = vmatprep.subr.mxu0 0.0
    %216 = vmatpush1.msra.mxu0 0.0
    %217 = vmatprep.subr.mxu0 0.0
    %218 = vmatpush1.msra.mxu0 0.0
    %219 = vmatprep.subr.mxu0 0.0
    %220 = vmatpush1.msra.mxu0 0.0
    %221 = vmatprep.mubr.f32.mxu0 0.0
    %222 = vmatmul.mubr.f32.gmra.mrb[0].mxu0 %v155
    %v223 = vpop.f32.mrb[0].mxu0
    %v224 = vadd.f32 %v151, %v223
    %v225 = vpop.f32.mrb[0].mxu0
    %226 = vdwg.mxu0
    %v227 = vld [vmem:[%s5] sm:$0x1]
    %v229 = vlaneseq
    %v230 = vshrl.u32 %v229, 7
    %v231 = vsub.s32 0, %v230
    %v232 = vrot.slane %v227, %v231
    %v234 = vadd.f32 %v224, %v232
    %v235 = vmax.f32 %v234, 0.0
    %v236 = vld [vmem:[%s2] sm:$0xf]
    %v237 = vld [vmem:[%s3] sm:$0xf]
    %v238 = vld [vmem:[#allocation2] sm:$0xff]
    %v239 = vld [vmem:[#allocation2 + $0x8] sm:$0xff]
    %v240 = vld [vmem:[#allocation2 + $0x10] sm:$0xff]
    %v241 = vld [vmem:[#allocation2 + $0x18] sm:$0xff]
    %v242 = vld [vmem:[#allocation2 + $0x20] sm:$0xff]
    %v243 = vld [vmem:[#allocation2 + $0x28] sm:$0xff]
    %v244 = vld [vmem:[#allocation2 + $0x30] sm:$0xff]
    %v245 = vld [vmem:[#allocation2 + $0x38] sm:$0xff]
    %v247 = vsel %vm80, %v236, 0
    %249 = vmatprep.subr.mxu0 0.0
    %250 = vmatpush1.msra.mxu0 %v242
    %251 = vmatprep.subr.mxu0 0.0
    %252 = vmatpush1.msra.mxu0 %v243
    %253 = vmatprep.subr.mxu0 0.0
    %254 = vmatpush1.msra.mxu0 %v244
    %255 = vmatprep.subr.mxu0 0.0
    %256 = vmatpush1.msra.mxu0 %v245
    %257 = vmatprep.subr.mxu0 0.0
    %258 = vmatpush1.msra.mxu0 0.0
    %259 = vmatprep.subr.mxu0 0.0
    %260 = vmatpush1.msra.mxu0 0.0
    %261 = vmatprep.subr.mxu0 0.0
    %262 = vmatpush1.msra.mxu0 0.0
    %263 = vmatprep.subr.mxu0 0.0
    %264 = vmatpush1.msra.mxu0 0.0
    %265 = vmatprep.subr.mxu0 0.0
    %266 = vmatpush1.msra.mxu0 0.0
    %267 = vmatprep.subr.mxu0 0.0
    %268 = vmatpush1.msra.mxu0 0.0
    %269 = vmatprep.subr.mxu0 0.0
    %270 = vmatpush1.msra.mxu0 0.0
    %271 = vmatprep.subr.mxu0 0.0
    %272 = vmatpush1.msra.mxu0 0.0
    %273 = vmatprep.subr.mxu0 0.0
    %274 = vmatpush1.msra.mxu0 0.0
    %275 = vmatprep.subr.mxu0 0.0
    %276 = vmatpush1.msra.mxu0 0.0
    %277 = vmatprep.subr.mxu0 0.0
    %278 = vmatpush1.msra.mxu0 0.0
    %279 = vmatprep.subr.mxu0 0.0
    %280 = vmatpush1.msra.mxu0 0.0
    %281 = vmatprep.subr.mxu0 0.0
    %282 = vmatpush1.msra.mxu0 0.0
    %283 = vmatprep.subr.mxu0 0.0
    %284 = vmatpush1.msra.mxu0 0.0
    %285 = vmatprep.subr.mxu0 0.0
    %286 = vmatpush1.msra.mxu0 0.0
    %287 = vmatprep.subr.mxu0 0.0
    %288 = vmatpush1.msra.mxu0 0.0
    %289 = vmatprep.subr.mxu0 0.0
    %290 = vmatpush1.msra.mxu0 0.0
    %291 = vmatprep.subr.mxu0 0.0
    %292 = vmatpush1.msra.mxu0 0.0
    %293 = vmatprep.subr.mxu0 0.0
    %294 = vmatpush1.msra.mxu0 0.0
    %295 = vmatprep.subr.mxu0 0.0
    %296 = vmatpush1.msra.mxu0 0.0
    %297 = vmatprep.subr.mxu0 0.0
    %298 = vmatpush1.msra.mxu0 0.0
    %299 = vmatprep.subr.mxu0 0.0
    %300 = vmatpush1.msra.mxu0 0.0
    %301 = vmatprep.subr.mxu0 0.0
    %302 = vmatpush1.msra.mxu0 0.0
    %303 = vmatprep.subr.mxu0 0.0
    %304 = vmatpush1.msra.mxu0 0.0
    %305 = vmatprep.subr.mxu0 0.0
    %306 = vmatpush1.msra.mxu0 0.0
    %307 = vmatprep.subr.mxu0 0.0
    %308 = vmatpush1.msra.mxu0 0.0
    %309 = vmatprep.subr.mxu0 0.0
    %310 = vmatpush1.msra.mxu0 0.0
    %311 = vmatprep.subr.mxu0 0.0
    %312 = vmatpush1.msra.mxu0 0.0
    %313 = vmatprep.mubr.f32.mxu0 0.0
    %314 = vmatmul.mubr.f32.gmra.mrb[0].mxu0 %v247
    %v315 = vpop.f32.mrb[0].mxu0
    %v316 = vadd.f32 0.0, %v315
    %v317 = vpop.f32.mrb[0].mxu0
    %318 = vdwg.mxu0
    %v320 = vsel %vm80, %v235, 0
    %322 = vmatprep.subr.mxu0 0.0
    %323 = vmatpush1.msra.mxu0 %v238
    %324 = vmatprep.subr.mxu0 0.0
    %325 = vmatpush1.msra.mxu0 %v239
    %326 = vmatprep.subr.mxu0 0.0
    %327 = vmatpush1.msra.mxu0 %v240
    %328 = vmatprep.subr.mxu0 0.0
    %329 = vmatpush1.msra.mxu0 %v241
    %330 = vmatprep.subr.mxu0 0.0
    %331 = vmatpush1.msra.mxu0 0.0
    %332 = vmatprep.subr.mxu0 0.0
    %333 = vmatpush1.msra.mxu0 0.0
    %334 = vmatprep.subr.mxu0 0.0
    %335 = vmatpush1.msra.mxu0 0.0
    %336 = vmatprep.subr.mxu0 0.0
    %337 = vmatpush1.msra.mxu0 0.0
    %338 = vmatprep.subr.mxu0 0.0
    %339 = vmatpush1.msra.mxu0 0.0
    %340 = vmatprep.subr.mxu0 0.0
    %341 = vmatpush1.msra.mxu0 0.0
    %342 = vmatprep.subr.mxu0 0.0
    %343 = vmatpush1.msra.mxu0 0.0
    %344 = vmatprep.subr.mxu0 0.0
    %345 = vmatpush1.msra.mxu0 0.0
    %346 = vmatprep.subr.mxu0 0.0
    %347 = vmatpush1.msra.mxu0 0.0
    %348 = vmatprep.subr.mxu0 0.0
    %349 = vmatpush1.msra.mxu0 0.0
    %350 = vmatprep.subr.mxu0 0.0
    %351 = vmatpush1.msra.mxu0 0.0
    %352 = vmatprep.subr.mxu0 0.0
    %353 = vmatpush1.msra.mxu0 0.0
    %354 = vmatprep.subr.mxu0 0.0
    %355 = vmatpush1.msra.mxu0 0.0
    %356 = vmatprep.subr.mxu0 0.0
    %357 = vmatpush1.msra.mxu0 0.0
    %358 = vmatprep.subr.mxu0 0.0
    %359 = vmatpush1.msra.mxu0 0.0
    %360 = vmatprep.subr.mxu0 0.0
    %361 = vmatpush1.msra.mxu0 0.0
    %362 = vmatprep.subr.mxu0 0.0
    %363 = vmatpush1.msra.mxu0 0.0
    %364 = vmatprep.subr.mxu0 0.0
    %365 = vmatpush1.msra.mxu0 0.0
    %366 = vmatprep.subr.mxu0 0.0
    %367 = vmatpush1.msra.mxu0 0.0
    %368 = vmatprep.subr.mxu0 0.0
    %369 = vmatpush1.msra.mxu0 0.0
    %370 = vmatprep.subr.mxu0 0.0
    %371 = vmatpush1.msra.mxu0 0.0
    %372 = vmatprep.subr.mxu0 0.0
    %373 = vmatpush1.msra.mxu0 0.0
    %374 = vmatprep.subr.mxu0 0.0
    %375 = vmatpush1.msra.mxu0 0.0
    %376 = vmatprep.subr.mxu0 0.0
    %377 = vmatpush1.msra.mxu0 0.0
    %378 = vmatprep.subr.mxu0 0.0
    %379 = vmatpush1.msra.mxu0 0.0
    %380 = vmatprep.subr.mxu0 0.0
    %381 = vmatpush1.msra.mxu0 0.0
    %382 = vmatprep.subr.mxu0 0.0
    %383 = vmatpush1.msra.mxu0 0.0
    %384 = vmatprep.subr.mxu0 0.0
    %385 = vmatpush1.msra.mxu0 0.0
    %386 = vmatprep.mubr.f32.mxu0 0.0
    %387 = vmatmul.mubr.f32.gmra.mrb[0].mxu0 %v320
    %v388 = vpop.f32.mrb[0].mxu0
    %v389 = vadd.f32 %v316, %v388
    %v390 = vpop.f32.mrb[0].mxu0
    %391 = vdwg.mxu0
    %v392 = vld [vmem:[%s7] sm:$0x1]
    %v394 = vlaneseq
    %v395 = vshrl.u32 %v394, 7
    %v396 = vsub.s32 0, %v395
    %v397 = vrot.slane %v392, %v396
    %v399 = vadd.f32 %v389, %v397
    %v400 = vxor.u32 %v399, 2147483648
    %v401 = vmul.f32 %v400, 1.442695
    %v402 = vpow.pop %v401
    %v403 = vadd.f32 %v402, 1.0
    %v404 = vrcp.pop %v403
    %v405 = vmul.f32 1.0, %v404
    %v406 = vtanh.pop %v399
    %408 = vrot.lane.b32.xlu0 %v237, 32
    %v409 = vpop.permute.xlu0 %408
    %v411 = vmul.f32 %v405, %v409
    %413 = vrot.lane.b32.xlu0 %v406, 64
    %v414 = vpop.permute.xlu0 %413
    %v416 = vmul.f32 %v405, %v414
    %418 = vrot.lane.b32.xlu0 %v416, 32
    %v419 = vpop.permute.xlu0 %418
    %v421 = vadd.f32 %v411, %v419
    %v422 = vtanh.pop %v421
    %424 = vrot.lane.b32.xlu0 %v422, 64
    %v425 = vpop.permute.xlu0 %424
    %v427 = vmul.f32 %v405, %v425
    %429 = vrot.lane.b32.xlu0 %v427, 32
    %v430 = vpop.permute.xlu0 %429
    %432 = vst.msk [vmem:[#allocation5] sm:$0xf] %vm56, %v430
    %434 = vrot.lane.b32.xlu0 %v421, 96
    %v435 = vpop.permute.xlu0 %434
    %437 = vst.msk [vmem:[#allocation6] sm:$0xf] %vm56, %v435
    %s438 = scalar_lea.vmem %s2, 4
    %v439 = vld [vmem:[%s438] sm:$0xf]
    %s440 = scalar_lea.vmem %s3, 4
    %v441 = vld [vmem:[%s440] sm:$0xf]
    %s442 = scalar_lea.vmem [#allocation2], 64
    %v443 = vld [vmem:[%s442] sm:$0xff]
    %v444 = vld [vmem:[%s442 + $0x8] sm:$0xff]
    %v445 = vld [vmem:[%s442 + $0x10] sm:$0xff]
    %v446 = vld [vmem:[%s442 + $0x18] sm:$0xff]
    %v447 = vld [vmem:[%s442 + $0x20] sm:$0xff]
    %v448 = vld [vmem:[%s442 + $0x28] sm:$0xff]
    %v449 = vld [vmem:[%s442 + $0x30] sm:$0xff]
    %v450 = vld [vmem:[%s442 + $0x38] sm:$0xff]
    %v452 = vsel %vm80, %v439, 0
    %454 = vmatprep.subr.mxu0 0.0
    %455 = vmatpush1.msra.mxu0 %v447
    %456 = vmatprep.subr.mxu0 0.0
    %457 = vmatpush1.msra.mxu0 %v448
    %458 = vmatprep.subr.mxu0 0.0
    %459 = vmatpush1.msra.mxu0 %v449
    %460 = vmatprep.subr.mxu0 0.0
    %461 = vmatpush1.msra.mxu0 %v450
    %462 = vmatprep.subr.mxu0 0.0
    %463 = vmatpush1.msra.mxu0 0.0
    %464 = vmatprep.subr.mxu0 0.0
    %465 = vmatpush1.msra.mxu0 0.0
    %466 = vmatprep.subr.mxu0 0.0
    %467 = vmatpush1.msra.mxu0 0.0
    %468 = vmatprep.subr.mxu0 0.0
    %469 = vmatpush1.msra.mxu0 0.0
    %470 = vmatprep.subr.mxu0 0.0
    %471 = vmatpush1.msra.mxu0 0.0
    %472 = vmatprep.subr.mxu0 0.0
    %473 = vmatpush1.msra.mxu0 0.0
    %474 = vmatprep.subr.mxu0 0.0
    %475 = vmatpush1.msra.mxu0 0.0
    %476 = vmatprep.subr.mxu0 0.0
    %477 = vmatpush1.msra.mxu0 0.0
    %478 = vmatprep.subr.mxu0 0.0
    %479 = vmatpush1.msra.mxu0 0.0
    %480 = vmatprep.subr.mxu0 0.0
    %481 = vmatpush1.msra.mxu0 0.0
    %482 = vmatprep.subr.mxu0 0.0
    %483 = vmatpush1.msra.mxu0 0.0
    %484 = vmatprep.subr.mxu0 0.0
    %485 = vmatpush1.msra.mxu0 0.0
    %486 = vmatprep.subr.mxu0 0.0
    %487 = vmatpush1.msra.mxu0 0.0
    %488 = vmatprep.subr.mxu0 0.0
    %489 = vmatpush1.msra.mxu0 0.0
    %490 = vmatprep.subr.mxu0 0.0
    %491 = vmatpush1.msra.mxu0 0.0
    %492 = vmatprep.subr.mxu0 0.0
    %493 = vmatpush1.msra.mxu0 0.0
    %494 = vmatprep.subr.mxu0 0.0
    %495 = vmatpush1.msra.mxu0 0.0
    %496 = vmatprep.subr.mxu0 0.0
    %497 = vmatpush1.msra.mxu0 0.0
    %498 = vmatprep.subr.mxu0 0.0
    %499 = vmatpush1.msra.mxu0 0.0
    %500 = vmatprep.subr.mxu0 0.0
    %501 = vmatpush1.msra.mxu0 0.0
    %502 = vmatprep.subr.mxu0 0.0
    %503 = vmatpush1.msra.mxu0 0.0
    %504 = vmatprep.subr.mxu0 0.0
    %505 = vmatpush1.msra.mxu0 0.0
    %506 = vmatprep.subr.mxu0 0.0
    %507 = vmatpush1.msra.mxu0 0.0
    %508 = vmatprep.subr.mxu0 0.0
    %509 = vmatpush1.msra.mxu0 0.0
    %510 = vmatprep.subr.mxu0 0.0
    %511 = vmatpush1.msra.mxu0 0.0
    %512 = vmatprep.subr.mxu0 0.0
    %513 = vmatpush1.msra.mxu0 0.0
    %514 = vmatprep.subr.mxu0 0.0
    %515 = vmatpush1.msra.mxu0 0.0
    %516 = vmatprep.subr.mxu0 0.0
    %517 = vmatpush1.msra.mxu0 0.0
    %518 = vmatprep.mubr.f32.mxu0 0.0
    %519 = vmatmul.mubr.f32.gmra.mrb[0].mxu0 %v452
    %v520 = vpop.f32.mrb[0].mxu0
    %v521 = vadd.f32 0.0, %v520
    %v522 = vpop.f32.mrb[0].mxu0
    %523 = vdwg.mxu0
    %v524 = vsel %vm80, %v430, 0
    %526 = vmatprep.subr.mxu0 0.0
    %527 = vmatpush1.msra.mxu0 %v443
    %528 = vmatprep.subr.mxu0 0.0
    %529 = vmatpush1.msra.mxu0 %v444
    %530 = vmatprep.subr.mxu0 0.0
    %531 = vmatpush1.msra.mxu0 %v445
    %532 = vmatprep.subr.mxu0 0.0
    %533 = vmatpush1.msra.mxu0 %v446
    %534 = vmatprep.subr.mxu0 0.0
    %535 = vmatpush1.msra.mxu0 0.0
    %536 = vmatprep.subr.mxu0 0.0
    %537 = vmatpush1.msra.mxu0 0.0
    %538 = vmatprep.subr.mxu0 0.0
    %539 = vmatpush1.msra.mxu0 0.0
    %540 = vmatprep.subr.mxu0 0.0
    %541 = vmatpush1.msra.mxu0 0.0
    %542 = vmatprep.subr.mxu0 0.0
    %543 = vmatpush1.msra.mxu0 0.0
    %544 = vmatprep.subr.mxu0 0.0
    %545 = vmatpush1.msra.mxu0 0.0
    %546 = vmatprep.subr.mxu0 0.0
    %547 = vmatpush1.msra.mxu0 0.0
    %548 = vmatprep.subr.mxu0 0.0
    %549 = vmatpush1.msra.mxu0 0.0
    %550 = vmatprep.subr.mxu0 0.0
    %551 = vmatpush1.msra.mxu0 0.0
    %552 = vmatprep.subr.mxu0 0.0
    %553 = vmatpush1.msra.mxu0 0.0
    %554 = vmatprep.subr.mxu0 0.0
    %555 = vmatpush1.msra.mxu0 0.0
    %556 = vmatprep.subr.mxu0 0.0
    %557 = vmatpush1.msra.mxu0 0.0
    %558 = vmatprep.subr.mxu0 0.0
    %559 = vmatpush1.msra.mxu0 0.0
    %560 = vmatprep.subr.mxu0 0.0
    %561 = vmatpush1.msra.mxu0 0.0
    %562 = vmatprep.subr.mxu0 0.0
    %563 = vmatpush1.msra.mxu0 0.0
    %564 = vmatprep.subr.mxu0 0.0
    %565 = vmatpush1.msra.mxu0 0.0
    %566 = vmatprep.subr.mxu0 0.0
    %567 = vmatpush1.msra.mxu0 0.0
    %568 = vmatprep.subr.mxu0 0.0
    %569 = vmatpush1.msra.mxu0 0.0
    %570 = vmatprep.subr.mxu0 0.0
    %571 = vmatpush1.msra.mxu0 0.0
    %572 = vmatprep.subr.mxu0 0.0
    %573 = vmatpush1.msra.mxu0 0.0
    %574 = vmatprep.subr.mxu0 0.0
    %575 = vmatpush1.msra.mxu0 0.0
    %576 = vmatprep.subr.mxu0 0.0
    %577 = vmatpush1.msra.mxu0 0.0
    %578 = vmatprep.subr.mxu0 0.0
    %579 = vmatpush1.msra.mxu0 0.0
    %580 = vmatprep.subr.mxu0 0.0
    %581 = vmatpush1.msra.mxu0 0.0
    %582 = vmatprep.subr.mxu0 0.0
    %583 = vmatpush1.msra.mxu0 0.0
    %584 = vmatprep.subr.mxu0 0.0
    %585 = vmatpush1.msra.mxu0 0.0
    %586 = vmatprep.subr.mxu0 0.0
    %587 = vmatpush1.msra.mxu0 0.0
    %588 = vmatprep.subr.mxu0 0.0
    %589 = vmatpush1.msra.mxu0 0.0
    %590 = vmatprep.mubr.f32.mxu0 0.0
    %591 = vmatmul.mubr.f32.gmra.mrb[0].mxu0 %v524
    %v592 = vpop.f32.mrb[0].mxu0
    %v593 = vadd.f32 %v521, %v592
    %v594 = vpop.f32.mrb[0].mxu0
    %595 = vdwg.mxu0
    %s596 = scalar_lea.vmem %s7, 1
    %v597 = vld [vmem:[%s596] sm:$0x1]
    %v599 = vlaneseq
    %v600 = vshrl.u32 %v599, 7
    %v601 = vsub.s32 0, %v600
    %v602 = vrot.slane %v597, %v601
    %v604 = vadd.f32 %v593, %v602
    %v605 = vxor.u32 %v604, 2147483648
    %v606 = vmul.f32 %v605, 1.442695
    %v607 = vpow.pop %v606
    %v608 = vadd.f32 %v607, 1.0
    %v609 = vrcp.pop %v608
    %v610 = vmul.f32 1.0, %v609
    %v611 = vtanh.pop %v604
    %613 = vrot.lane.b32.xlu0 %v441, 32
    %v614 = vpop.permute.xlu0 %613
    %v616 = vmul.f32 %v610, %v614
    %618 = vrot.lane.b32.xlu0 %v611, 64
    %v619 = vpop.permute.xlu0 %618
    %v621 = vmul.f32 %v610, %v619
    %623 = vrot.lane.b32.xlu0 %v621, 32
    %v624 = vpop.permute.xlu0 %623
    %v626 = vadd.f32 %v616, %v624
    %v627 = vtanh.pop %v626
    %629 = vrot.lane.b32.xlu0 %v627, 64
    %v630 = vpop.permute.xlu0 %629
    %v632 = vmul.f32 %v610, %v630
    %634 = vrot.lane.b32.xlu0 %v632, 32
    %v635 = vpop.permute.xlu0 %634
    %s637 = scalar_lea.vmem [#allocation5], 4
    %638 = vst.msk [vmem:[%s637] sm:$0xf] %vm56, %v635
    %640 = vrot.lane.b32.xlu0 %v626, 96
    %v641 = vpop.permute.xlu0 %640
    %s643 = scalar_lea.vmem [#allocation6], 4
    %644 = vst.msk [vmem:[%s643] sm:$0xf] %vm56, %v641
    // Predicated region
    $region38: #{tpu_custom_call.1} parent=1 // pred_check
      _
    $region39: #{tpu_custom_call.1} parent=1 // pred_check_branch
      %646 = sbr.rel (0) target = $region41
    $region40: #{tpu_custom_call.1} parent=1 // pred_region
      %s648 = ssub.s32 128, 128
      %649 = vsyncadd [#allocation4], %s648
      %s650 = sshll.u32 [#allocation5], 4
      %s651 = int_to_ptr.vmem [resolvable:$true] %s650
      %656 = dma.vmem_to_hbm [thread:$0]  %s651, 128, %s8, [#allocation4], 64, 64, 4
    $region41: #{tpu_custom_call.1} parent=1 // pred_fallthru
      _
    // Predicated region
    $region42: #{tpu_custom_call.1} parent=1 // pred_check
      _
    $region43: #{tpu_custom_call.1} parent=1 // pred_check_branch
      %658 = sbr.rel (0) target = $region45
    $region44: #{tpu_custom_call.1} parent=1 // pred_region
      %s660 = ssub.s32 128, 128
      %661 = vsyncadd [#allocation7], %s660
      %s662 = sshll.u32 [#allocation6], 4
      %s663 = int_to_ptr.vmem [resolvable:$true] %s662
      %668 = dma.vmem_to_hbm [thread:$0]  %s663, 128, %s9, [#allocation7], 64, 64, 4
    $region45: #{tpu_custom_call.1} parent=1 // pred_fallthru
      _
    // Predicated region
    $region46: #{tpu_custom_call.1} parent=1 // pred_check
      _
    $region47: #{tpu_custom_call.1} parent=1 // pred_check_branch
      %670 = sbr.rel (0) target = $region49
    $region48: #{tpu_custom_call.1} parent=1 // pred_region
      %671 = dma.done [#allocation4], 128
    $region49: #{tpu_custom_call.1} parent=1 // pred_fallthru
      _
    // Predicated region
    $region50: #{tpu_custom_call.1} parent=1 // pred_check
      _
    $region51: #{tpu_custom_call.1} parent=1 // pred_check_branch
      %673 = sbr.rel (0) target = $region53
    $region52: #{tpu_custom_call.1} parent=1 // pred_region
      %674 = dma.done [#allocation7], 128
    $region53: #{tpu_custom_call.1} parent=1 // pred_fallthru
      _
    %675 = vsyncpa [#allocation3], 1
    %676 = vsyncpa [#allocation4], 1
    %677 = vsyncpa [#allocation7], 1

</llo_original>
